<compile_context>
chip_gen: v6e
topology: v6e:2x2x1
jax: 0.10.0
libtpu: 0.0.40
codegen_flags: <defaults>
</compile_context>

<pallas_src>
import functools

import jax
import jax.numpy as jnp
from jax.experimental import pallas as pl
from jax.experimental.pallas import tpu as pltpu


_VMEM_LIMIT_BYTES = 32 * 1024 * 1024   # explicit scoped-VMEM limit (all gens)
_BLOCK_BYTES = 4 * 1024 * 1024         # per x-block f32 budget
_MAX_TILE_B = 2048                     # diminishing returns past ~1-2K rows


# ---------------------------------------------------------------------------
# Kernels
# ---------------------------------------------------------------------------
def _stats_kernel(rate_ref, x_ref, mean_ref, var_ref,
                  nmean_ref, nvar_ref, nstd_ref,
                  sum_sc, sq_sc, *, total_b, tile_b, need_mask):
    """Accumulate per-feature sum / sum-of-squares over batch tiles; apply the
    incremental running-stat update on the last batch tile of each D-tile."""
    i = pl.program_id(1)                       # batch-tile index (last axis)

    @pl.when(i == 0)
    def _():
        sum_sc[...] = jnp.zeros_like(sum_sc)
        sq_sc[...] = jnp.zeros_like(sq_sc)

    x = x_ref[...].astype(jnp.float32)         # (tile_b, tile_d)
    if need_mask:                              # static: only when B % tile_b != 0
        rows = jax.lax.broadcasted_iota(jnp.int32, x.shape, 0) + i * tile_b
        x = jnp.where(rows < total_b, x, 0.0)

    # Single pass: sum and sum-of-squares (E[x^2]-E[x]^2 with clamp below).
    # NOTE: could be pushed to the MXU via ones(1, tile_b) @ x if the VPU ever
    # binds; this kernel is HBM-bound at realistic (B, D).
    sum_sc[...] += jnp.sum(x, axis=0, keepdims=True)
    sq_sc[...] += jnp.sum(x * x, axis=0, keepdims=True)

    @pl.when(i == pl.num_programs(1) - 1)
    def _():
        rate = rate_ref[0, 0]                  # scalar in SMEM
        inv_n = 1.0 / total_b                  # compile-time constant
        mean_x = sum_sc[...] * inv_n
        var_x = jnp.maximum(sq_sc[...] * inv_n - mean_x * mean_x, 0.0)

        mean = mean_ref[...]
        var = var_ref[...]
        delta = mean_x - mean
        new_mean = mean + rate * delta
        new_var = var + rate * (var_x - var + delta * (mean_x - new_mean))
        new_var = jnp.maximum(new_var, 0.0)    # rounding can dip below 0
        nmean_ref[...] = new_mean
        nvar_ref[...] = new_var
        nstd_ref[...] = jnp.sqrt(new_var)


def _normalize_kernel(x_ref, mean_ref, std_ref, y_ref, *, eps):
    """(x - mean) / (std + eps) on one batch tile.  Exact reciprocal: the
    operand is only (1, D), so approx=True would save nothing measurable."""
    x = x_ref[...].astype(jnp.float32)
    inv = pl.reciprocal(std_ref[...] + eps, approx=False)   # (1, D)
    y_ref[...] = ((x - mean_ref[...]) * inv).astype(y_ref.dtype)


# ---------------------------------------------------------------------------
# Tile sizing
# ---------------------------------------------------------------------------
def _pick_tile_b(b, d_cols):
    rows = max(8, _BLOCK_BYTES // (max(d_cols, 1) * 4))
    tb = min(b, _MAX_TILE_B, rows)
    if tb < b:
        tb = max(8, (tb // 8) * 8)     # sublane-aligned unless it's the full batch
    return tb


def _pick_tile_d(d):
    if d % 128 != 0 or d <= 128:
        return d                       # full feature dim (legal as a block dim)
    # multiple of 128: split so the stats grid's parallel d-axis has >=2 steps
    return min(512, max(128, (d // 2) // 128 * 128))


# ---------------------------------------------------------------------------
# pallas_call builders (cached per shape / dtype / tiling)
# ---------------------------------------------------------------------------
def _make_normalize_call(b, d, dtype, eps, tile_b):
    return pl.pallas_call(
        functools.partial(_normalize_kernel, eps=eps),
        out_shape=jax.ShapeDtypeStruct((b, d), dtype),
        grid_spec=pltpu.PrefetchScalarGridSpec(
            num_scalar_prefetch=0,
            grid=(pl.cdiv(b, tile_b),),
            in_specs=[
                pl.BlockSpec((tile_b, d), lambda i: (i, 0)),   # x
                pl.BlockSpec((1, d), lambda i: (0, 0)),        # mean (resident)
                pl.BlockSpec((1, d), lambda i: (0, 0)),        # std  (resident)
            ],
            out_specs=pl.BlockSpec((tile_b, d), lambda i: (i, 0)),
        ),
        compiler_params=pltpu.CompilerParams(
            dimension_semantics=("parallel",),
            vmem_limit_bytes=_VMEM_LIMIT_BYTES),
    )


def _make_stats_call(b, d, tile_b, tile_d):
    kernel = functools.partial(_stats_kernel, total_b=b, tile_b=tile_b,
                               need_mask=(b % tile_b != 0))
    stat = jax.ShapeDtypeStruct((1, d), jnp.float32)
    return pl.pallas_call(
        kernel,
        out_shape=(stat, stat, stat),            # new mean, new var, new std
        grid_spec=pltpu.PrefetchScalarGridSpec(
            num_scalar_prefetch=0,
            grid=(pl.cdiv(d, tile_d), pl.cdiv(b, tile_b)),  # reduction (b) last
            in_specs=[
                pl.BlockSpec(memory_space=pltpu.MemorySpace.SMEM),     # rate (1,1)
                pl.BlockSpec((tile_b, tile_d), lambda j, i: (i, j)),   # x
                pl.BlockSpec((1, tile_d), lambda j, i: (0, j)),        # mean
                pl.BlockSpec((1, tile_d), lambda j, i: (0, j)),        # var
            ],
            out_specs=[
                pl.BlockSpec((1, tile_d), lambda j, i: (0, j)),        # new mean
                pl.BlockSpec((1, tile_d), lambda j, i: (0, j)),        # new var
                pl.BlockSpec((1, tile_d), lambda j, i: (0, j)),        # new std
            ],
            scratch_shapes=[pltpu.VMEM((1, tile_d), jnp.float32),
                            pltpu.VMEM((1, tile_d), jnp.float32)],
        ),
        # running mean/var update in place (no extra HBM stat buffers)
        input_output_aliases={2: 0, 3: 1},
        compiler_params=pltpu.CompilerParams(
            dimension_semantics=("parallel", "arbitrary"),
            vmem_limit_bytes=_VMEM_LIMIT_BYTES),
    )


@functools.lru_cache(maxsize=None)
def _build_train_step(b, d, dtype_name, eps, tile_b_stats, tile_d, tile_b_norm):
    dtype = jnp.dtype(dtype_name)
    stats_call = _make_stats_call(b, d, tile_b_stats, tile_d)
    norm_call = _make_normalize_call(b, d, dtype, eps, tile_b_norm)

    def step(rate, x, mean, var):
        rate_arr = jnp.asarray(rate, jnp.float32).reshape(1, 1)
        new_mean, new_var, new_std = stats_call(rate_arr, x, mean, var)
        y = norm_call(x, new_mean, new_std)
        return y, new_mean, new_var, new_std

    # mean / var buffers are consumed and replaced every step -> donate them.
    return jax.jit(step, donate_argnums=(2, 3))


@functools.lru_cache(maxsize=None)
def _build_eval_step(b, d, dtype_name, eps, tile_b):
    norm_call = _make_normalize_call(b, d, jnp.dtype(dtype_name), eps, tile_b)
    return jax.jit(norm_call)


# ---------------------------------------------------------------------------
# Module wrapper (state kept as JAX arrays + a Python int count, mirroring the
# PyTorch buffers + python attribute)
# ---------------------------------------------------------------------------
class EmpiricalNormalization:
    def __init__(self, shape, eps=0.01, until=None):
        if isinstance(shape, (tuple, list)):
            assert len(shape) == 1, "kernel supports 1-D feature shape (B, D) inputs"
            # TODO(synk): multi-dim feature shapes would need a flatten pass.
            d = int(shape[0])
        else:
            d = int(shape)
        self.eps = float(eps)
        self.until = until
        self._d = d
        self._mean = jnp.zeros((1, d), jnp.float32)
        self._var = jnp.ones((1, d), jnp.float32)
        self._std = jnp.ones((1, d), jnp.float32)
        self.count = 0   # TODO(synk): host-side count/until branch is not jit/scan-able
        self.training = True

    @property
    def mean(self):
        return self._mean[0]

    @property
    def std(self):
        return self._std[0]

    def __call__(self, x):
        b, d = x.shape
        assert d == self._d, f"expected feature dim {self._d}, got {d}"
        dtype_name = str(jnp.dtype(x.dtype))

        update = self.training and not (
            self.until is not None and self.count >= self.until)
        if update:
            count_x = b
            self.count += count_x
            rate = count_x / self.count
            tile_d = _pick_tile_d(d)
            fn = _build_train_step(b, d, dtype_name, self.eps,
                                   _pick_tile_b(b, tile_d), tile_d,
                                   _pick_tile_b(b, d))
            y, self._mean, self._var, self._std = fn(rate, x, self._mean, self._var)
            return y

        fn = _build_eval_step(b, d, dtype_name, self.eps, _pick_tile_b(b, d))
        return fn(x, self._mean, self._std)

    def inverse(self, y):
        # glue-level inverse (not on the hot path)
        return y * (self.std + self.eps) + self.mean


# ---------------------------------------------------------------------------
# Reference (plain JAX) for sanity check
# ---------------------------------------------------------------------------
def _ref_train(x, mean, var, count, eps):
    count_x = x.shape[0]
    count = count + count_x
    rate = count_x / count
    mean_x = jnp.mean(x, axis=0, keepdims=True)
    var_x = jnp.var(x, axis=0, keepdims=True)
    delta_mean = mean_x - mean
    mean = mean + rate * delta_mean
    var = var + rate * (var_x - var + delta_mean * (mean_x - mean))
    std = jnp.sqrt(var)
    return (x - mean) / (std + eps), mean, var, std, count


if __name__ == "__main__":
    B, D = 8, 32
    key = jax.random.PRNGKey(0)
    k1, k2, k3 = jax.random.split(key, 3)
    x1 = jax.random.normal(k1, (B, D), jnp.float32) * 2.0 + 1.5
    x2 = jax.random.normal(k2, (B, D), jnp.float32) * 0.5 - 3.0

    norm = EmpiricalNormalization(D, eps=0.01, until=None)

    # --- training-mode forward, two successive batches (stateful update) ---
    y1 = norm(x1)
    y2 = norm(x2)
    jax.block_until_ready(y2)

    rm = jnp.zeros((1, D)); rv = jnp.ones((1, D)); rc = 0
    ry1, rm, rv, rs, rc = _ref_train(x1, rm, rv, rc, 0.01)
    ry2, rm, rv, rs, rc = _ref_train(x2, rm, rv, rc, 0.01)
    assert jnp.allclose(y1, ry1, atol=1e-4, rtol=1e-4)
    assert jnp.allclose(y2, ry2, atol=1e-4, rtol=1e-4)
    assert jnp.allclose(norm.mean, rm[0], atol=1e-4, rtol=1e-4)
    assert jnp.allclose(norm.std, rs[0], atol=1e-4, rtol=1e-4)

    # --- eval-mode forward (no update) ---
    norm.training = False
    y_eval = norm(x1)
    jax.block_until_ready(y_eval)
    ref_eval = (x1 - rm) / (rs + 0.01)
    assert jnp.allclose(y_eval, ref_eval, atol=1e-4, rtol=1e-4)

    # --- exercise the batch-tiled reduction + edge-masking path directly ---
    B2 = 20
    x3 = jax.random.normal(k3, (B2, D), jnp.float32) * 1.3 + 0.7
    step = _build_train_step(B2, D, "float32", 0.01,
                             tile_b_stats=8, tile_d=D, tile_b_norm=8)
    m0 = jnp.zeros((1, D), jnp.float32)
    v0 = jnp.ones((1, D), jnp.float32)
    y3, m3, v3, s3 = step(1.0, x3, m0, v0)   # first batch -> rate = 1.0
    jax.block_until_ready(y3)
    ry3, rm3, rv3, rs3, _ = _ref_train(x3, jnp.zeros((1, D)), jnp.ones((1, D)), 0, 0.01)
    assert jnp.allclose(y3, ry3, atol=1e-4, rtol=1e-4)
    assert jnp.allclose(m3, rm3, atol=1e-4, rtol=1e-4)
    assert jnp.allclose(s3, rs3, atol=1e-4, rtol=1e-4)

    print("KERNEL_OK")
</pallas_src>

<mosaic_0001>
module attributes {stable_mosaic.version = 11 : i64} {
  func.func @_normalize_kernel(%arg0: i32, %arg1: memref<8x32xf32, #tpu.memory_space<vmem>>, %arg2: memref<1x32xf32, #tpu.memory_space<vmem>>, %arg3: memref<1x32xf32, #tpu.memory_space<vmem>>, %arg4: memref<8x32xf32, #tpu.memory_space<vmem>>) attributes {dimension_semantics = [#tpu.dimension_semantics<parallel>], iteration_bounds = array<i64: 1>, scalar_prefetch = 0 : i64, scratch_operands = 0 : i64, tpu.core_type = #tpu.core_type<tc>, window_params = [{transform_indices = @transform_0, window_bounds = array<i64: 8, 32>}, {pipeline_mode = #tpu.pipeline_mode<synchronous>, transform_indices = @transform_1, window_bounds = array<i64: 1, 32>}, {pipeline_mode = #tpu.pipeline_mode<synchronous>, transform_indices = @transform_2, window_bounds = array<i64: 1, 32>}, {transform_indices = @transform_3, window_bounds = array<i64: 8, 32>}]} {
    %c0 = arith.constant 0 : index
    %c0_0 = arith.constant 0 : index
    %0 = vector.load %arg1[%c0, %c0_0] : memref<8x32xf32, #tpu.memory_space<vmem>>, vector<8x32xf32>
    %c0_1 = arith.constant 0 : index
    %c0_2 = arith.constant 0 : index
    %1 = vector.load %arg3[%c0_1, %c0_2] : memref<1x32xf32, #tpu.memory_space<vmem>>, vector<1x32xf32>
    %cst = arith.constant 0.00999999977 : f32
    %2 = vector.broadcast %cst : f32 to vector<1x32xf32>
    %3 = arith.addf %1, %2 : vector<1x32xf32>
    %4 = tpu.reciprocal %3 : vector<1x32xf32> -> vector<1x32xf32>
    %c0_3 = arith.constant 0 : index
    %c0_4 = arith.constant 0 : index
    %5 = vector.load %arg2[%c0_3, %c0_4] : memref<1x32xf32, #tpu.memory_space<vmem>>, vector<1x32xf32>
    %6 = vector.broadcast %5 : vector<1x32xf32> to vector<8x32xf32>
    %7 = arith.subf %0, %6 : vector<8x32xf32>
    %8 = vector.broadcast %4 : vector<1x32xf32> to vector<8x32xf32>
    %9 = arith.mulf %7, %8 : vector<8x32xf32>
    %c0_5 = arith.constant 0 : index
    %c0_6 = arith.constant 0 : index
    %10 = vector.load %arg4[%c0_5, %c0_6] : memref<8x32xf32, #tpu.memory_space<vmem>>, vector<8x32xf32>
    tpu.vector_store %arg4[%c0_5, %c0_6], %9 {strides = array<i32>} : memref<8x32xf32, #tpu.memory_space<vmem>>, vector<8x32xf32>,
    return
  }
  func.func @transform_0(%arg0: i32) -> (i32, i32) {
    %c0_i32 = arith.constant 0 : i32
    %c0_i32_0 = arith.constant 0 : i32
    return %arg0, %c0_i32 : i32, i32
  }
  func.func @transform_1(%arg0: i32) -> (i32, i32) {
    %c0_i32 = arith.constant 0 : i32
    %c0_i32_0 = arith.constant 0 : i32
    %c0_i32_1 = arith.constant 0 : i32
    return %c0_i32, %c0_i32_0 : i32, i32
  }
  func.func @transform_2(%arg0: i32) -> (i32, i32) {
    %c0_i32 = arith.constant 0 : i32
    %c0_i32_0 = arith.constant 0 : i32
    %c0_i32_1 = arith.constant 0 : i32
    return %c0_i32, %c0_i32_0 : i32, i32
  }
  func.func @transform_3(%arg0: i32) -> (i32, i32) {
    %c0_i32 = arith.constant 0 : i32
    %c0_i32_0 = arith.constant 0 : i32
    return %arg0, %c0_i32 : i32, i32
  }
}

module attributes {stable_mosaic.version = 11 : i64} {
  func.func @_stats_kernel(%arg0: i32, %arg1: i32, %arg2: memref<1x1xf32, #tpu.memory_space<smem>>, %arg3: memref<8x32xf32, #tpu.memory_space<vmem>>, %arg4: memref<1x32xf32, #tpu.memory_space<vmem>>, %arg5: memref<1x32xf32, #tpu.memory_space<vmem>>, %arg6: memref<1x32xf32, #tpu.memory_space<vmem>>, %arg7: memref<1x32xf32, #tpu.memory_space<vmem>>, %arg8: memref<1x32xf32, #tpu.memory_space<vmem>>, %arg9: memref<1x32xf32, #tpu.memory_space<vmem>>, %arg10: memref<1x32xf32, #tpu.memory_space<vmem>>) attributes {dimension_semantics = [#tpu.dimension_semantics<parallel>, #tpu.dimension_semantics<arbitrary>], iteration_bounds = array<i64: 1, 1>, scalar_prefetch = 0 : i64, scratch_operands = 2 : i64, tpu.core_type = #tpu.core_type<tc>, window_params = [{transform_indices = @transform_0, window_bounds = array<i64: 1, 1>}, {transform_indices = @transform_1, window_bounds = array<i64: 8, 32>}, {transform_indices = @transform_2, window_bounds = array<i64: 1, 32>}, {transform_indices = @transform_3, window_bounds = array<i64: 1, 32>}, {transform_indices = @transform_4, window_bounds = array<i64: 1, 32>}, {transform_indices = @transform_5, window_bounds = array<i64: 1, 32>}, {transform_indices = @transform_6, window_bounds = array<i64: 1, 32>}]} {
    %c0_i32 = arith.constant 0 : i32
    %0 = arith.cmpi eq, %arg1, %c0_i32 : i32
    %1 = arith.extui %0 : i1 to i32
    %c0_i32_0 = arith.constant 0 : i32
    %2 = arith.cmpi ne, %1, %c0_i32_0 : i32
    scf.if %2 {
      %cst_13 = arith.constant 0.000000e+00 : f32
      %18 = vector.broadcast %cst_13 : f32 to vector<1x32xf32>
      %c0_14 = arith.constant 0 : index
      %c0_15 = arith.constant 0 : index
      %19 = vector.load %arg9[%c0_14, %c0_15] : memref<1x32xf32, #tpu.memory_space<vmem>>, vector<1x32xf32>
      tpu.vector_store %arg9[%c0_14, %c0_15], %18 {strides = array<i32>} : memref<1x32xf32, #tpu.memory_space<vmem>>, vector<1x32xf32>,
      %cst_16 = arith.constant 0.000000e+00 : f32
      %20 = vector.broadcast %cst_16 : f32 to vector<1x32xf32>
      %c0_17 = arith.constant 0 : index
      %c0_18 = arith.constant 0 : index
      %21 = vector.load %arg10[%c0_17, %c0_18] : memref<1x32xf32, #tpu.memory_space<vmem>>, vector<1x32xf32>
      tpu.vector_store %arg10[%c0_17, %c0_18], %20 {strides = array<i32>} : memref<1x32xf32, #tpu.memory_space<vmem>>, vector<1x32xf32>,
    } else {
    }
    %c0 = arith.constant 0 : index
    %c0_1 = arith.constant 0 : index
    %3 = vector.load %arg3[%c0, %c0_1] : memref<8x32xf32, #tpu.memory_space<vmem>>, vector<8x32xf32>
    %c0_2 = arith.constant 0 : index
    %c0_3 = arith.constant 0 : index
    %4 = vector.load %arg9[%c0_2, %c0_3] : memref<1x32xf32, #tpu.memory_space<vmem>>, vector<1x32xf32>
    %cst = arith.constant dense<0.000000e+00> : vector<32xf32>
    %5 = vector.multi_reduction <add>, %3, %cst [0] : vector<8x32xf32> to vector<32xf32>
    %6 = vector.shape_cast %5 : vector<32xf32> to vector<1x32xf32>
    %7 = arith.addf %4, %6 : vector<1x32xf32>
    %c0_4 = arith.constant 0 : index
    %c0_5 = arith.constant 0 : index
    %8 = vector.load %arg9[%c0_4, %c0_5] : memref<1x32xf32, #tpu.memory_space<vmem>>, vector<1x32xf32>
    tpu.vector_store %arg9[%c0_4, %c0_5], %7 {strides = array<i32>} : memref<1x32xf32, #tpu.memory_space<vmem>>, vector<1x32xf32>,
    %c0_6 = arith.constant 0 : index
    %c0_7 = arith.constant 0 : index
    %9 = vector.load %arg10[%c0_6, %c0_7] : memref<1x32xf32, #tpu.memory_space<vmem>>, vector<1x32xf32>
    %10 = arith.mulf %3, %3 : vector<8x32xf32>
    %cst_8 = arith.constant dense<0.000000e+00> : vector<32xf32>
    %11 = vector.multi_reduction <add>, %10, %cst_8 [0] : vector<8x32xf32> to vector<32xf32>
    %12 = vector.shape_cast %11 : vector<32xf32> to vector<1x32xf32>
    %13 = arith.addf %9, %12 : vector<1x32xf32>
    %c0_9 = arith.constant 0 : index
    %c0_10 = arith.constant 0 : index
    %14 = vector.load %arg10[%c0_9, %c0_10] : memref<1x32xf32, #tpu.memory_space<vmem>>, vector<1x32xf32>
    tpu.vector_store %arg10[%c0_9, %c0_10], %13 {strides = array<i32>} : memref<1x32xf32, #tpu.memory_space<vmem>>, vector<1x32xf32>,
    %c0_i32_11 = arith.constant 0 : i32
    %15 = arith.cmpi eq, %arg1, %c0_i32_11 : i32
    %16 = arith.extui %15 : i1 to i32
    %c0_i32_12 = arith.constant 0 : i32
    %17 = arith.cmpi ne, %16, %c0_i32_12 : i32
    scf.if %17 {
      %c0_13 = arith.constant 0 : index
      %c0_14 = arith.constant 0 : index
      %18 = memref.load %arg2[%c0_13, %c0_14] : memref<1x1xf32, #tpu.memory_space<smem>>
      %c0_15 = arith.constant 0 : index
      %c0_16 = arith.constant 0 : index
      %19 = vector.load %arg9[%c0_15, %c0_16] : memref<1x32xf32, #tpu.memory_space<vmem>>, vector<1x32xf32>
      %cst_17 = arith.constant 1.250000e-01 : f32
      %20 = vector.broadcast %cst_17 : f32 to vector<1x32xf32>
      %21 = arith.mulf %19, %20 : vector<1x32xf32>
      %c0_18 = arith.constant 0 : index
      %c0_19 = arith.constant 0 : index
      %22 = vector.load %arg10[%c0_18, %c0_19] : memref<1x32xf32, #tpu.memory_space<vmem>>, vector<1x32xf32>
      %cst_20 = arith.constant 1.250000e-01 : f32
      %23 = vector.broadcast %cst_20 : f32 to vector<1x32xf32>
      %24 = arith.mulf %22, %23 : vector<1x32xf32>
      %25 = arith.mulf %21, %21 : vector<1x32xf32>
      %26 = arith.subf %24, %25 : vector<1x32xf32>
      %cst_21 = arith.constant 0.000000e+00 : f32
      %27 = vector.broadcast %cst_21 : f32 to vector<1x32xf32>
      %28 = arith.maximumf %26, %27 : vector<1x32xf32>
      %c0_22 = arith.constant 0 : index
      %c0_23 = arith.constant 0 : index
      %29 = vector.load %arg4[%c0_22, %c0_23] : memref<1x32xf32, #tpu.memory_space<vmem>>, vector<1x32xf32>
      %c0_24 = arith.constant 0 : index
      %c0_25 = arith.constant 0 : index
      %30 = vector.load %arg5[%c0_24, %c0_25] : memref<1x32xf32, #tpu.memory_space<vmem>>, vector<1x32xf32>
      %31 = arith.subf %21, %29 : vector<1x32xf32>
      %32 = vector.broadcast %18 : f32 to vector<1x32xf32>
      %33 = arith.mulf %32, %31 : vector<1x32xf32>
      %34 = arith.addf %29, %33 : vector<1x32xf32>
      %35 = arith.subf %28, %30 : vector<1x32xf32>
      %36 = arith.subf %21, %34 : vector<1x32xf32>
      %37 = arith.mulf %31, %36 : vector<1x32xf32>
      %38 = arith.addf %35, %37 : vector<1x32xf32>
      %39 = vector.broadcast %18 : f32 to vector<1x32xf32>
      %40 = arith.mulf %39, %38 : vector<1x32xf32>
      %41 = arith.addf %30, %40 : vector<1x32xf32>
      %cst_26 = arith.constant 0.000000e+00 : f32
      %42 = vector.broadcast %cst_26 : f32 to vector<1x32xf32>
      %43 = arith.maximumf %41, %42 : vector<1x32xf32>
      %c0_27 = arith.constant 0 : index
      %c0_28 = arith.constant 0 : index
      %44 = vector.load %arg6[%c0_27, %c0_28] : memref<1x32xf32, #tpu.memory_space<vmem>>, vector<1x32xf32>
      tpu.vector_store %arg6[%c0_27, %c0_28], %34 {strides = array<i32>} : memref<1x32xf32, #tpu.memory_space<vmem>>, vector<1x32xf32>,
      %c0_29 = arith.constant 0 : index
      %c0_30 = arith.constant 0 : index
      %45 = vector.load %arg7[%c0_29, %c0_30] : memref<1x32xf32, #tpu.memory_space<vmem>>, vector<1x32xf32>
      tpu.vector_store %arg7[%c0_29, %c0_30], %43 {strides = array<i32>} : memref<1x32xf32, #tpu.memory_space<vmem>>, vector<1x32xf32>,
      %46 = math.sqrt %43 : vector<1x32xf32>
      %c0_31 = arith.constant 0 : index
      %c0_32 = arith.constant 0 : index
      %47 = vector.load %arg8[%c0_31, %c0_32] : memref<1x32xf32, #tpu.memory_space<vmem>>, vector<1x32xf32>
      tpu.vector_store %arg8[%c0_31, %c0_32], %46 {strides = array<i32>} : memref<1x32xf32, #tpu.memory_space<vmem>>, vector<1x32xf32>,
    } else {
    }
    return
  }
  func.func @transform_0(%arg0: i32, %arg1: i32) -> (i32, i32) {
    %c0_i32 = arith.constant 0 : i32
    %c0_i32_0 = arith.constant 0 : i32
    %c0_i32_1 = arith.constant 0 : i32
    return %c0_i32, %c0_i32_0 : i32, i32
  }
  func.func @transform_1(%arg0: i32, %arg1: i32) -> (i32, i32) {
    %c0_i32 = arith.constant 0 : i32
    return %arg1, %arg0 : i32, i32
  }
  func.func @transform_2(%arg0: i32, %arg1: i32) -> (i32, i32) {
    %c0_i32 = arith.constant 0 : i32
    %c0_i32_0 = arith.constant 0 : i32
    return %c0_i32, %arg0 : i32, i32
  }
  func.func @transform_3(%arg0: i32, %arg1: i32) -> (i32, i32) {
    %c0_i32 = arith.constant 0 : i32
    %c0_i32_0 = arith.constant 0 : i32
    return %c0_i32, %arg0 : i32, i32
  }
  func.func @transform_4(%arg0: i32, %arg1: i32) -> (i32, i32) {
    %c0_i32 = arith.constant 0 : i32
    %c0_i32_0 = arith.constant 0 : i32
    return %c0_i32, %arg0 : i32, i32
  }
  func.func @transform_5(%arg0: i32, %arg1: i32) -> (i32, i32) {
    %c0_i32 = arith.constant 0 : i32
    %c0_i32_0 = arith.constant 0 : i32
    return %c0_i32, %arg0 : i32, i32
  }
  func.func @transform_6(%arg0: i32, %arg1: i32) -> (i32, i32) {
    %c0_i32 = arith.constant 0 : i32
    %c0_i32_0 = arith.constant 0 : i32
    return %c0_i32, %arg0 : i32, i32
  }
}

</mosaic_0001>

<llo_original>
// kernel: step.3
$region0: #{step.3}
  #allocation0 [shape = 'u32[]', space=smem, size = 0x4, offset = 0x4, fixed_abs, tag = 'smem constant byte address 0x4 - core index']
  #allocation1 [shape = 'u32[144,128]{1,0:T(1,128)}', space=vmem, size = 0x12000, scoped, tag = 'internal scratch']
  %s0 = inlined_call_operand.vmem [shape: f32[8,32], index: 0, kind: input, shape index: {}]
  %s1 = inlined_call_operand.vmem [shape: f32[1,32], index: 1, kind: input, shape index: {}]
  %s2 = inlined_call_operand.vmem [shape: f32[1,32], index: 2, kind: input, shape index: {}]
  %s3 = inlined_call_operand.hbm [shape: f32[8,32], index: 3, kind: output, shape index: {}]
  %s4 = sld [smem:[#allocation0]]
  $region22: #{step.3} parent=0
    _
  %s6 = ssub.s32 1, %s4
  %s7 = scalar_select 0, %s6, %s4
  $region1: #{step.3} parent=0
    #allocation2 [shape = 'u8[4096]{0}', space=vmem, size = 0x1000, scoped, tag = 'output window, operand 0, single buffered']
    #allocation3 [shape = 's32[1]{0}', space=sflag, size = 0x4, scoped, tag = 'scoped memory for step.3']
    %8 = vsyncpa [#allocation3], 0
    // Predicated region
    $region2: #{step.3} parent=1 // pred_check
      _
    $region3: #{step.3} parent=1 // pred_check_branch
      %10 = sbr.rel (0) target = $region5
    $region4: #{step.3} parent=1 // pred_region
      _
    $region5: #{step.3} parent=1 // pred_fallthru
      _
    // Predicated region
    $region6: #{step.3} parent=1 // pred_check
      _
    $region7: #{step.3} parent=1 // pred_check_branch
      %12 = sbr.rel (0) target = $region9
    $region8: #{step.3} parent=1 // pred_region
      _
    $region9: #{step.3} parent=1 // pred_fallthru
      _
    // Predicated region
    $region10: #{step.3} parent=1 // pred_check
      _
    $region11: #{step.3} parent=1 // pred_check_branch
      %14 = sbr.rel (0) target = $region13
    $region12: #{step.3} parent=1 // pred_region
      _
    $region13: #{step.3} parent=1 // pred_fallthru
      _
    %v15 = vld [vmem:[%s0] sm:$0xff]
    %v16 = vld [vmem:[%s2] sm:$0x1]
    %v17 = vadd.f32 %v16, 0.01
    %v18 = vrcp.pop %v17
    %v19 = vld [vmem:[%s1] sm:$0x1]
    %v21 = vlaneseq
    %v22 = vshrl.u32 %v21, 7
    %v23 = vsub.s32 0, %v22
    %v24 = vrot.slane %v19, %v23
    %v26 = vsub.f32 %v15, %v24
    %v28 = vlaneseq
    %v29 = vshrl.u32 %v28, 7
    %v30 = vsub.s32 0, %v29
    %v31 = vrot.slane %v18, %v30
    %v33 = vmul.f32 %v26, %v31
    %vm34 = vcmask 261120
    %35 = vst.msk [vmem:[#allocation2] sm:$0xff] %vm34, %v33
    // Predicated region
    $region14: #{step.3} parent=1 // pred_check
      _
    $region15: #{step.3} parent=1 // pred_check_branch
      %37 = sbr.rel (0) target = $region17
    $region16: #{step.3} parent=1 // pred_region
      %s39 = ssub.s32 128, 128
      %40 = vsyncadd [#allocation3], %s39
      %s42 = sshll.u32 [#allocation2], 4
      %s43 = int_to_ptr.vmem [resolvable:$true] %s42
      %45 = dma.vmem_to_hbm [thread:$0]  %s43, 128, %s3, [#allocation3]
    $region17: #{step.3} parent=1 // pred_fallthru
      _
    // Predicated region
    $region18: #{step.3} parent=1 // pred_check
      _
    $region19: #{step.3} parent=1 // pred_check_branch
      %47 = sbr.rel (0) target = $region21
    $region20: #{step.3} parent=1 // pred_region
      %48 = dma.done [#allocation3], 128
    $region21: #{step.3} parent=1 // pred_fallthru
      _
    %49 = vsyncpa [#allocation3], 1

// kernel: step.2
$region0: #{step.2}
  #allocation0 [shape = 'u32[]', space=smem, size = 0x4, offset = 0x4, fixed_abs, tag = 'smem constant byte address 0x4 - core index']
  #allocation1 [shape = 'u32[144,128]{1,0:T(1,128)}', space=vmem, size = 0x12000, scoped, tag = 'internal scratch']
  #allocation2 [shape = 'f32[1,32]{1,0:T(1,128)}', space=vmem, size = 0x200, scoped, tag = 'scratch operand']
  #allocation3 [shape = 'f32[1,32]{1,0:T(1,128)}', space=vmem, size = 0x200, scoped, tag = 'scratch operand']
  #allocation4 [shape = 'f32[1,1]{1,0:T(1,128)S(6)}', space=smem, size = 0x200, scoped, tag = 'scoped memory for step.2']
  %s0 = inlined_call_operand.<no memory space> [shape: f32[1,1], index: 0, kind: input, shape index: {}]
  %s1 = inlined_call_operand.hbm [shape: f32[8,32], index: 1, kind: input, shape index: {}]
  %s2 = inlined_call_operand.vmem [shape: f32[1,32], index: 2, kind: input, shape index: {}, may-alias: {2,4}]
  %s3 = inlined_call_operand.vmem [shape: f32[1,32], index: 3, kind: input, shape index: {}, may-alias: {3,5}]
  %s4 = inlined_call_operand.vmem [shape: f32[1,32], index: 4, kind: output, shape index: {0}, may-alias: {2,4}]
  %s5 = inlined_call_operand.vmem [shape: f32[1,32], index: 5, kind: output, shape index: {1}, may-alias: {3,5}]
  %s6 = inlined_call_operand.vmem [shape: f32[1,32], index: 6, kind: output, shape index: {2}]
  %7 = xla_tuple %s4, %s5, %s6
  %s8 = sld [smem:[#allocation0]]
  $region54: #{step.2} parent=0
    _
  %s10 = ssub.s32 1, %s8
  %s11 = scalar_select 0, %s10, %s8
  %12 = sst [smem:[#allocation4]] %s0
  $region1: #{step.2} parent=0
    #allocation5 [shape = 'u8[4096]{0}', space=vmem, size = 0x1000, scoped, tag = 'input window, operand 1, single buffered']
    #allocation6 [shape = 's32[1]{0}', space=sflag, size = 0x4, scoped, tag = 'scoped memory for step.2']
    %13 = vsyncpa [#allocation6], 0
    // Predicated region
    $region2: #{step.2} parent=1 // pred_check
      _
    $region3: #{step.2} parent=1 // pred_check_branch
      %15 = sbr.rel (0) target = $region5
    $region4: #{step.2} parent=1 // pred_region
      _
    $region5: #{step.2} parent=1 // pred_fallthru
      _
    // Predicated region
    $region6: #{step.2} parent=1 // pred_check
      _
    $region7: #{step.2} parent=1 // pred_check_branch
      %17 = sbr.rel (0) target = $region9
    $region8: #{step.2} parent=1 // pred_region
      %s19 = ssub.s32 128, 128
      %20 = vsyncadd [#allocation6], %s19
      %s22 = sshll.u32 [#allocation5], 4
      %s23 = int_to_ptr.vmem [resolvable:$true] %s22
      %25 = dma.hbm_to_vmem [thread:$0]  %s1, 128, %s23, [#allocation6]
    $region9: #{step.2} parent=1 // pred_fallthru
      _
    // Predicated region
    $region10: #{step.2} parent=1 // pred_check
      _
    $region11: #{step.2} parent=1 // pred_check_branch
      %27 = sbr.rel (0) target = $region13
    $region12: #{step.2} parent=1 // pred_region
      _
    $region13: #{step.2} parent=1 // pred_fallthru
      _
    // Predicated region
    $region14: #{step.2} parent=1 // pred_check
      _
    $region15: #{step.2} parent=1 // pred_check_branch
      %29 = sbr.rel (0) target = $region17
    $region16: #{step.2} parent=1 // pred_region
      _
    $region17: #{step.2} parent=1 // pred_fallthru
      _
    // Predicated region
    $region18: #{step.2} parent=1 // pred_check
      _
    $region19: #{step.2} parent=1 // pred_check_branch
      %31 = sbr.rel (0) target = $region21
    $region20: #{step.2} parent=1 // pred_region
      %32 = dma.done [#allocation6], 128
    $region21: #{step.2} parent=1 // pred_fallthru
      _
    %p33 = scmp.eq.s32.totalorder 0, 0
    // Predicated region
    $region22: #{step.2} parent=1 // pred_check
      %p34 = pneg %p33
    $region23: #{step.2} parent=1 // pred_check_branch
      %36 = sbr.rel (%p34) target = $region25
    $region24: #{step.2} parent=1 // pred_region
      %vm37 = vcmask 253952
      %38 = vst.msk [vmem:[#allocation2] sm:$0x1] %vm37, 0.0
      %39 = vst.msk [vmem:[#allocation3] sm:$0x1] %vm37, 0.0
    $region25: #{step.2} parent=1 // pred_fallthru
      _
    %v40 = vld [vmem:[#allocation5] sm:$0xff]
    %v41 = vld [vmem:[#allocation2] sm:$0x1]
    %vm42 = vcmask 261120
    %v43 = vsel %vm42, %v40, 0.0
    %v44 = vrot.slane %v43, 4
    %v45 = vadd.f32 %v43, %v44
    %v46 = vrot.slane %v45, 2
    %v47 = vadd.f32 %v45, %v46
    %v48 = vrot.slane %v47, 1
    %v49 = vadd.f32 %v47, %v48
    %v50 = vadd.f32 %v41, %v49
    %vm51 = vcmask 253952
    %52 = vst.msk [vmem:[#allocation2] sm:$0x1] %vm51, %v50
    %v53 = vld [vmem:[#allocation3] sm:$0x1]
    %v54 = vmul.f32 %v40, %v40
    %v55 = vsel %vm42, %v54, 0.0
    %v56 = vrot.slane %v55, 4
    %v57 = vadd.f32 %v55, %v56
    %v58 = vrot.slane %v57, 2
    %v59 = vadd.f32 %v57, %v58
    %v60 = vrot.slane %v59, 1
    %v61 = vadd.f32 %v59, %v60
    %v62 = vadd.f32 %v53, %v61
    %63 = vst.msk [vmem:[#allocation3] sm:$0x1] %vm51, %v62
    // Predicated region
    $region26: #{step.2} parent=1 // pred_check
      %p64 = pneg %p33
    $region27: #{step.2} parent=1 // pred_check_branch
      %66 = sbr.rel (%p64) target = $region29
    $region28: #{step.2} parent=1 // pred_region
      %s67 = sld [smem:[#allocation4]]
      %v68 = vld [vmem:[#allocation2] sm:$0x1]
      %v69 = vmul.f32 %v68, 0.125
      %v70 = vld [vmem:[#allocation3] sm:$0x1]
      %v71 = vmul.f32 %v70, 0.125
      %v72 = vmul.f32 %v69, %v69
      %v73 = vsub.f32 %v71, %v72
      %v74 = vmax.f32 %v73, 0.0
      %v75 = vld [vmem:[%s2] sm:$0x1]
      %v76 = vld [vmem:[%s3] sm:$0x1]
      %v77 = vsub.f32 %v69, %v75
      %v78 = vstv %s67
      %v79 = vmul.f32 %v78, %v77
      %v80 = vadd.f32 %v75, %v79
      %v81 = vsub.f32 %v74, %v76
      %v82 = vsub.f32 %v69, %v80
      %v83 = vmul.f32 %v77, %v82
      %v84 = vadd.f32 %v81, %v83
      %v85 = vmul.f32 %v78, %v84
      %v86 = vadd.f32 %v76, %v85
      %v87 = vmax.f32 %v86, 0.0
      %88 = vst.msk [vmem:[%s4] sm:$0x1] %vm51, %v80
      %89 = vst.msk [vmem:[%s5] sm:$0x1] %vm51, %v87
      %v90 = vrsqrt.pop %v87
      %v91 = vmul.f32 %v87, %v90
      %vm92 = vcmp.eq.f32.partialorder %v87, inf
      %v93 = vsel %vm92, %v87, %v91
      %vm94 = vcmp.eq.f32.partialorder %v87, 0.0
      %v95 = vand.u32 %v87, 2147483648
      %v96 = vsel %vm94, %v95, %v93
      %97 = vst.msk [vmem:[%s6] sm:$0x1] %vm51, %v96
    $region29: #{step.2} parent=1 // pred_fallthru
      _
    // Predicated region
    $region30: #{step.2} parent=1 // pred_check
      _
    $region31: #{step.2} parent=1 // pred_check_branch
      %99 = sbr.rel (0) target = $region33
    $region32: #{step.2} parent=1 // pred_region
      _
    $region33: #{step.2} parent=1 // pred_fallthru
      _
    // Predicated region
    $region34: #{step.2} parent=1 // pred_check
      _
    $region35: #{step.2} parent=1 // pred_check_branch
      %101 = sbr.rel (0) target = $region37
    $region36: #{step.2} parent=1 // pred_region
      _
    $region37: #{step.2} parent=1 // pred_fallthru
      _
    // Predicated region
    $region38: #{step.2} parent=1 // pred_check
      _
    $region39: #{step.2} parent=1 // pred_check_branch
      %103 = sbr.rel (0) target = $region41
    $region40: #{step.2} parent=1 // pred_region
      _
    $region41: #{step.2} parent=1 // pred_fallthru
      _
    // Predicated region
    $region42: #{step.2} parent=1 // pred_check
      _
    $region43: #{step.2} parent=1 // pred_check_branch
      %105 = sbr.rel (0) target = $region45
    $region44: #{step.2} parent=1 // pred_region
      _
    $region45: #{step.2} parent=1 // pred_fallthru
      _
    // Predicated region
    $region46: #{step.2} parent=1 // pred_check
      _
    $region47: #{step.2} parent=1 // pred_check_branch
      %107 = sbr.rel (0) target = $region49
    $region48: #{step.2} parent=1 // pred_region
      _
    $region49: #{step.2} parent=1 // pred_fallthru
      _
    // Predicated region
    $region50: #{step.2} parent=1 // pred_check
      _
    $region51: #{step.2} parent=1 // pred_check_branch
      %109 = sbr.rel (0) target = $region53
    $region52: #{step.2} parent=1 // pred_region
      _
    $region53: #{step.2} parent=1 // pred_fallthru
      _
    %110 = vsyncpa [#allocation6], 1

</llo_original>
